<compile_context>
chip_gen: v7x
topology: tpu7x:2x2x1
jax: 0.10.0
libtpu: 0.0.40
codegen_flags: <defaults>
</compile_context>

<pallas_src>
import functools

import jax
import jax.numpy as jnp
import numpy as np
from jax.experimental import pallas as pl
from jax.experimental.pallas import tpu as pltpu


def _conv_kernel(L, Lout, PMAX, branch_dims, roffs, cdtype,
                 x_ref, wr_ref, br_ref, wbig_ref, bbig_ref,
                 yraw_ref, stats_ref,
                 red_scr, pool_scr):
    """Pass 1 (per batch row): all convs + BN batch-statistics accumulation."""
    n = pl.program_id(0)
    x = x_ref[0]                                              # (L, Cin) f32

    # ---- fused 1x1 reduce convs (all four branches, one matmul) ----------
    red = jnp.dot(x.astype(cdtype), wr_ref[...],
                  preferred_element_type=jnp.float32) + br_ref[...]
    # zero halo emulates the zero padding of the second conv's input
    red_scr[...] = jnp.zeros(red_scr.shape, red_scr.dtype)
    red_scr[pl.ds(PMAX, L), :] = red

    # ---- MaxPool1d(kernel=3, stride=2, padding=1), kept in f32 -----------
    pool_scr[...] = jnp.full(pool_scr.shape, -1e30, pool_scr.dtype)
    pool_scr[pl.ds(1, L), :] = x
    pooled = pool_scr[pl.ds(0, Lout, stride=2), :]
    for j in (1, 2):
        pooled = jnp.maximum(pooled, pool_scr[pl.ds(j, Lout, stride=2), :])

    # ---- stride-2 tap reads, shared by all four conv branches ------------
    taps = [red_scr[pl.ds(d, Lout, stride=2), :] for d in range(2 * PMAX + 1)]

    cols = []
    for (k, r, _o), roff in zip(branch_dims, roffs):
        p = k // 2
        for j in range(k):
            cols.append(taps[PMAX - p + j][:, roff:roff + r])
    cols.append(pooled)
    big = jnp.concatenate(cols, axis=1).astype(cdtype)        # (Lout, K_all)

    # ---- one block-diagonal matmul: channel-concatenated branch outputs --
    y = jnp.dot(big, wbig_ref[...],
                preferred_element_type=jnp.float32) + bbig_ref[...]
    yraw_ref[0] = y                                           # lane-dense store

    # ---- BatchNorm batch statistics, accumulated across the batch axis ---
    s = jnp.concatenate([jnp.sum(y, axis=0, keepdims=True),
                         jnp.sum(y * y, axis=0, keepdims=True)], axis=0)

    @pl.when(n == 0)
    def _():
        stats_ref[...] = jnp.zeros(stats_ref.shape, stats_ref.dtype)

    stats_ref[...] += s


def _bn_relu_kernel(inv_count, eps, yraw_ref, stats_ref, g_ref, b_ref, out_ref):
    """Pass 2 (per batch row): training-mode BatchNorm + ReLU."""
    y = yraw_ref[0]                                           # (Lout, C_pad)
    st = stats_ref[...]
    mean = st[0:1, :] * inv_count
    var = jnp.maximum(st[1:2, :] * inv_count - mean * mean, 0.0)
    scale = jax.lax.rsqrt(var + eps) * g_ref[...]
    shift = b_ref[...] - mean * scale
    out_ref[0] = jnp.maximum(y * scale + shift, 0.0)


def subsample_layer_forward(x, params, compute_dtype=jnp.float32):
    """x: (N, C_in, L) float32 (PyTorch NCL). Returns (N, C_total, Lout)."""
    N, Cin, L = (int(d) for d in x.shape)
    Lout = (L - 1) // 2 + 1
    PMAX = 4                                 # largest conv padding (k=9 -> p=4)
    Lpad = L + 2 * PMAX
    eps = 1e-5

    x_nlc = jnp.transpose(x, (0, 2, 1)).astype(jnp.float32)   # channels on lanes

    names = ('b3', 'b5', 'b7', 'b9')
    ks = (3, 5, 7, 9)
    rs = tuple(int(params[nm]['wr'].shape[0]) for nm in names)
    outs = tuple(int(params[nm]['w'].shape[0]) for nm in names)
    op = int(params['pool']['w'].shape[0])
    R_total = sum(rs)
    C_total = sum(outs) + op
    C_pad = ((C_total + 127) // 128) * 128          # lane-dense activations
    K_branch = sum(k * r for k, r in zip(ks, rs))
    K_all = K_branch + Cin

    # fused 1x1 reduce weights: (Cin, R_total)
    wr_cat = jnp.concatenate([params[nm]['wr'][:, :, 0].T for nm in names], axis=1)
    br_cat = jnp.concatenate([params[nm]['br'] for nm in names])[None, :]

    # block-diagonal weight for the 4 k-tap convs + pool 1x1 conv: (K_all, C_pad)
    wbig = jnp.zeros((K_all, C_pad), jnp.float32)
    bbig = jnp.zeros((1, C_pad), jnp.float32)
    gbig = jnp.zeros((1, C_pad), jnp.float32)
    bebig = jnp.zeros((1, C_pad), jnp.float32)
    krow, coff, racc = 0, 0, 0
    roffs = []
    for nm, k, r, o in zip(names, ks, rs, outs):
        bp = params[nm]
        wm = jnp.transpose(bp['w'], (2, 1, 0)).reshape(k * r, o)   # rows: j*r + c
        wbig = wbig.at[krow:krow + k * r, coff:coff + o].set(wm)
        bbig = bbig.at[0, coff:coff + o].set(bp['b'])
        gbig = gbig.at[0, coff:coff + o].set(bp['g'])
        bebig = bebig.at[0, coff:coff + o].set(bp['beta'])
        krow += k * r
        coff += o
        roffs.append(racc)
        racc += r
    pp = params['pool']
    wbig = wbig.at[K_branch:K_branch + Cin, coff:coff + op].set(pp['w'][:, :, 0].T)
    bbig = bbig.at[0, coff:coff + op].set(pp['b'])
    gbig = gbig.at[0, coff:coff + op].set(pp['g'])
    bebig = bebig.at[0, coff:coff + op].set(pp['beta'])

    branch_dims = tuple(zip(ks, rs, outs))
    conv_kernel = functools.partial(_conv_kernel, L, Lout, PMAX,
                                    branch_dims, tuple(roffs), compute_dtype)

    # Pass 1: convolutions + BN statistics. The batch axis is a reduction for
    # the stats accumulator -> "arbitrary".
    yraw, stats = pl.pallas_call(
        conv_kernel,
        grid=(N,),
        in_specs=[
            pl.BlockSpec((1, L, Cin), lambda n: (n, 0, 0)),
            pl.BlockSpec((Cin, R_total), lambda n: (0, 0)),
            pl.BlockSpec((1, R_total), lambda n: (0, 0)),
            pl.BlockSpec((K_all, C_pad), lambda n: (0, 0)),
            pl.BlockSpec((1, C_pad), lambda n: (0, 0)),
        ],
        out_specs=[
            pl.BlockSpec((1, Lout, C_pad), lambda n: (n, 0, 0)),
            pl.BlockSpec((2, C_pad), lambda n: (0, 0)),
        ],
        out_shape=[
            jax.ShapeDtypeStruct((N, Lout, C_pad), jnp.float32),
            jax.ShapeDtypeStruct((2, C_pad), jnp.float32),
        ],
        scratch_shapes=[
            pltpu.VMEM((Lpad, R_total), jnp.float32),    # zero-padded reduce out
            pltpu.VMEM((L + 2, Cin), jnp.float32),       # -inf padded pool input
        ],
        compiler_params=pltpu.CompilerParams(
            dimension_semantics=("arbitrary",)),
    )(x_nlc, wr_cat.astype(compute_dtype), br_cat,
      wbig.astype(compute_dtype), bbig)

    # Pass 2: BatchNorm (training-mode batch stats) + ReLU, fully parallel.
    bn_kernel = functools.partial(_bn_relu_kernel, 1.0 / float(N * Lout), eps)
    out_nlc = pl.pallas_call(
        bn_kernel,
        grid=(N,),
        in_specs=[
            pl.BlockSpec((1, Lout, C_pad), lambda n: (n, 0, 0)),
            pl.BlockSpec((2, C_pad), lambda n: (0, 0)),
            pl.BlockSpec((1, C_pad), lambda n: (0, 0)),
            pl.BlockSpec((1, C_pad), lambda n: (0, 0)),
        ],
        out_specs=pl.BlockSpec((1, Lout, C_pad), lambda n: (n, 0, 0)),
        out_shape=jax.ShapeDtypeStruct((N, Lout, C_pad), jnp.float32),
        compiler_params=pltpu.CompilerParams(
            dimension_semantics=("parallel",)),
    )(yraw, stats, gbig, bebig)

    # TODO(synk): for very long sequences add a second grid axis over Lout
    # blocks (with an input halo in the index_map); at typical sizes one
    # length block per batch row fits comfortably in VMEM on v5e/v6e/v7x.
    return jnp.transpose(out_nlc[:, :, :C_total], (0, 2, 1))


def init_params(key, in_channels, reduce_3x3, out_3x3, reduce_5x5, out_5x5,
                reduce_7x7, out_7x7, reduce_9x9, out_9x9, out_pool):
    keys = iter(jax.random.split(key, 32))

    def conv(cout, cin, k):
        bound = 1.0 / np.sqrt(cin * k)
        w = jax.random.uniform(next(keys), (cout, cin, k), jnp.float32, -bound, bound)
        b = jax.random.uniform(next(keys), (cout,), jnp.float32, -bound, bound)
        return w, b

    def branch(r, o, k):
        wr, br = conv(r, in_channels, 1)
        w, b = conv(o, r, k)
        return {'wr': wr, 'br': br, 'w': w, 'b': b,
                'g': jnp.ones((o,), jnp.float32), 'beta': jnp.zeros((o,), jnp.float32)}

    p = {'b3': branch(reduce_3x3, out_3x3, 3),
         'b5': branch(reduce_5x5, out_5x5, 5),
         'b7': branch(reduce_7x7, out_7x7, 7),
         'b9': branch(reduce_9x9, out_9x9, 9)}
    wp_, bp_ = conv(out_pool, in_channels, 1)
    p['pool'] = {'w': wp_, 'b': bp_, 'g': jnp.ones((out_pool,), jnp.float32),
                 'beta': jnp.zeros((out_pool,), jnp.float32)}
    return p


def reference_forward(x, params, eps=1e-5):
    # Pure-JAX reference mirroring the PyTorch module (training-mode BN).
    def conv1d(x, w, b, stride=1, padding=0):
        y = jax.lax.conv_general_dilated(
            x, w, window_strides=(stride,), padding=[(padding, padding)],
            dimension_numbers=('NCH', 'OIH', 'NCH'))
        return y + b[None, :, None]

    def bn_relu(y, g, be):
        mean = jnp.mean(y, axis=(0, 2), keepdims=True)
        var = jnp.mean((y - mean) ** 2, axis=(0, 2), keepdims=True)
        yn = (y - mean) / jnp.sqrt(var + eps) * g[None, :, None] + be[None, :, None]
        return jnp.maximum(yn, 0.0)

    outs = []
    for name, k in (('b3', 3), ('b5', 5), ('b7', 7), ('b9', 9)):
        bp_ = params[name]
        r = conv1d(x, bp_['wr'], bp_['br'])
        y = conv1d(r, bp_['w'], bp_['b'], stride=2, padding=k // 2)
        outs.append(bn_relu(y, bp_['g'], bp_['beta']))
    mp = jax.lax.reduce_window(x, -jnp.inf, jax.lax.max,
                               (1, 1, 3), (1, 1, 2), [(0, 0), (0, 0), (1, 1)])
    pp = params['pool']
    y = conv1d(mp, pp['w'], pp['b'])
    outs.append(bn_relu(y, pp['g'], pp['beta']))
    return jnp.concatenate(outs, axis=1)


if __name__ == "__main__":
    key = jax.random.PRNGKey(0)
    kp, kx = jax.random.split(key)
    N, Cin, L = 2, 8, 16
    params = init_params(kp, Cin, 4, 8, 4, 8, 4, 8, 4, 8, 8)
    x = jax.random.normal(kx, (N, Cin, L), jnp.float32)

    ref = jax.block_until_ready(reference_forward(x, params))

    # f32 compute path: tight check.
    out = jax.block_until_ready(subsample_layer_forward(x, params))
    assert out.shape == ref.shape == (N, 40, (L - 1) // 2 + 1), (out.shape, ref.shape)
    np.testing.assert_allclose(np.asarray(out), np.asarray(ref), atol=1e-3, rtol=1e-3)

    # bf16 MXU fast path (v6e/v7x): f32 accumulation + f32 BN, looser tolerance.
    out_bf16 = jax.block_until_ready(
        subsample_layer_forward(x, params, compute_dtype=jnp.bfloat16))
    np.testing.assert_allclose(np.asarray(out_bf16), np.asarray(ref),
                               atol=1e-1, rtol=1e-1)

    print("KERNEL_OK")
</pallas_src>

<mosaic_0001>
module attributes {stable_mosaic.version = 11 : i64} {
  func.func @_conv_kernel(%arg0: i32, %arg1: memref<1x16x8xf32, #tpu.memory_space<vmem>>, %arg2: memref<8x16xf32, #tpu.memory_space<vmem>>, %arg3: memref<1x16xf32, #tpu.memory_space<vmem>>, %arg4: memref<104x128xf32, #tpu.memory_space<vmem>>, %arg5: memref<1x128xf32, #tpu.memory_space<vmem>>, %arg6: memref<1x8x128xf32, #tpu.memory_space<vmem>>, %arg7: memref<2x128xf32, #tpu.memory_space<vmem>>, %arg8: memref<24x16xf32, #tpu.memory_space<vmem>>, %arg9: memref<18x8xf32, #tpu.memory_space<vmem>>) attributes {dimension_semantics = [#tpu.dimension_semantics<arbitrary>], iteration_bounds = array<i64: 2>, scalar_prefetch = 0 : i64, scratch_operands = 2 : i64, tpu.core_type = #tpu.core_type<tc>, window_params = [{transform_indices = @transform_0, window_bounds = array<i64: 1, 16, 8>}, {pipeline_mode = #tpu.pipeline_mode<synchronous>, transform_indices = @transform_1, window_bounds = array<i64: 8, 16>}, {pipeline_mode = #tpu.pipeline_mode<synchronous>, transform_indices = @transform_2, window_bounds = array<i64: 1, 16>}, {pipeline_mode = #tpu.pipeline_mode<synchronous>, transform_indices = @transform_3, window_bounds = array<i64: 104, 128>}, {pipeline_mode = #tpu.pipeline_mode<synchronous>, transform_indices = @transform_4, window_bounds = array<i64: 1, 128>}, {transform_indices = @transform_5, window_bounds = array<i64: 1, 8, 128>}, {pipeline_mode = #tpu.pipeline_mode<synchronous>, transform_indices = @transform_6, window_bounds = array<i64: 2, 128>}]} {
    %c0 = arith.constant 0 : index
    %c0_0 = arith.constant 0 : index
    %c0_1 = arith.constant 0 : index
    %0 = vector.load %arg1[%c0, %c0_0, %c0_1] : memref<1x16x8xf32, #tpu.memory_space<vmem>>, vector<1x16x8xf32>
    %1 = vector.shape_cast %0 : vector<1x16x8xf32> to vector<16x8xf32>
    %c0_2 = arith.constant 0 : index
    %c0_3 = arith.constant 0 : index
    %2 = vector.load %arg2[%c0_2, %c0_3] : memref<8x16xf32, #tpu.memory_space<vmem>>, vector<8x16xf32>
    %cst = arith.constant dense<0.000000e+00> : vector<16x16xf32>
    %3 = tpu.matmul %1, %2, %cst {dimension_numbers = #tpu.dot_dimension_numbers<[1], [0], [0], [1], [0, 0, 1, 1], [], []>} : vector<16x8xf32>, vector<8x16xf32>, vector<16x16xf32> -> vector<16x16xf32>
    %c0_4 = arith.constant 0 : index
    %c0_5 = arith.constant 0 : index
    %4 = vector.load %arg3[%c0_4, %c0_5] : memref<1x16xf32, #tpu.memory_space<vmem>>, vector<1x16xf32>
    %5 = vector.broadcast %4 : vector<1x16xf32> to vector<16x16xf32>
    %6 = arith.addf %3, %5 : vector<16x16xf32>
    %cst_6 = arith.constant 0.000000e+00 : f32
    %7 = vector.broadcast %cst_6 : f32 to vector<24x16xf32>
    %c0_7 = arith.constant 0 : index
    %c0_8 = arith.constant 0 : index
    %8 = vector.load %arg8[%c0_7, %c0_8] : memref<24x16xf32, #tpu.memory_space<vmem>>, vector<24x16xf32>
    tpu.vector_store %arg8[%c0_7, %c0_8], %7 {strides = array<i32>} : memref<24x16xf32, #tpu.memory_space<vmem>>, vector<24x16xf32>,
    %c4 = arith.constant 4 : index
    %c0_9 = arith.constant 0 : index
    %9 = vector.load %arg8[%c4, %c0_9] : memref<24x16xf32, #tpu.memory_space<vmem>>, vector<16x16xf32>
    tpu.vector_store %arg8[%c4, %c0_9], %6 {strides = array<i32>} : memref<24x16xf32, #tpu.memory_space<vmem>>, vector<16x16xf32>,
    %cst_10 = arith.constant -1.000000e+30 : f32
    %10 = vector.broadcast %cst_10 : f32 to vector<18x8xf32>
    %c0_11 = arith.constant 0 : index
    %c0_12 = arith.constant 0 : index
    %11 = vector.load %arg9[%c0_11, %c0_12] : memref<18x8xf32, #tpu.memory_space<vmem>>, vector<18x8xf32>
    tpu.vector_store %arg9[%c0_11, %c0_12], %10 {strides = array<i32>} : memref<18x8xf32, #tpu.memory_space<vmem>>, vector<18x8xf32>,
    %c1 = arith.constant 1 : index
    %c0_13 = arith.constant 0 : index
    %12 = vector.load %arg9[%c1, %c0_13] : memref<18x8xf32, #tpu.memory_space<vmem>>, vector<16x8xf32>
    tpu.vector_store %arg9[%c1, %c0_13], %1 {strides = array<i32>} : memref<18x8xf32, #tpu.memory_space<vmem>>, vector<16x8xf32>,
    %c0_14 = arith.constant 0 : index
    %c0_15 = arith.constant 0 : index
    %13 = tpu.strided_load %arg9[%c0_14, %c0_15] {strides = array<i32: 2, 1>} : memref<18x8xf32, #tpu.memory_space<vmem>>, vector<8x8xf32>
    %c1_16 = arith.constant 1 : index
    %c0_17 = arith.constant 0 : index
    %14 = tpu.strided_load %arg9[%c1_16, %c0_17] {strides = array<i32: 2, 1>} : memref<18x8xf32, #tpu.memory_space<vmem>>, vector<8x8xf32>
    %15 = arith.maximumf %13, %14 : vector<8x8xf32>
    %c2 = arith.constant 2 : index
    %c0_18 = arith.constant 0 : index
    %16 = tpu.strided_load %arg9[%c2, %c0_18] {strides = array<i32: 2, 1>} : memref<18x8xf32, #tpu.memory_space<vmem>>, vector<8x8xf32>
    %17 = arith.maximumf %15, %16 : vector<8x8xf32>
    %c0_19 = arith.constant 0 : index
    %c0_20 = arith.constant 0 : index
    %18 = tpu.strided_load %arg8[%c0_19, %c0_20] {strides = array<i32: 2, 1>} : memref<24x16xf32, #tpu.memory_space<vmem>>, vector<8x16xf32>
    %c1_21 = arith.constant 1 : index
    %c0_22 = arith.constant 0 : index
    %19 = tpu.strided_load %arg8[%c1_21, %c0_22] {strides = array<i32: 2, 1>} : memref<24x16xf32, #tpu.memory_space<vmem>>, vector<8x16xf32>
    %c2_23 = arith.constant 2 : index
    %c0_24 = arith.constant 0 : index
    %20 = tpu.strided_load %arg8[%c2_23, %c0_24] {strides = array<i32: 2, 1>} : memref<24x16xf32, #tpu.memory_space<vmem>>, vector<8x16xf32>
    %c3 = arith.constant 3 : index
    %c0_25 = arith.constant 0 : index
    %21 = tpu.strided_load %arg8[%c3, %c0_25] {strides = array<i32: 2, 1>} : memref<24x16xf32, #tpu.memory_space<vmem>>, vector<8x16xf32>
    %c4_26 = arith.constant 4 : index
    %c0_27 = arith.constant 0 : index
    %22 = tpu.strided_load %arg8[%c4_26, %c0_27] {strides = array<i32: 2, 1>} : memref<24x16xf32, #tpu.memory_space<vmem>>, vector<8x16xf32>
    %c5 = arith.constant 5 : index
    %c0_28 = arith.constant 0 : index
    %23 = tpu.strided_load %arg8[%c5, %c0_28] {strides = array<i32: 2, 1>} : memref<24x16xf32, #tpu.memory_space<vmem>>, vector<8x16xf32>
    %c6 = arith.constant 6 : index
    %c0_29 = arith.constant 0 : index
    %24 = tpu.strided_load %arg8[%c6, %c0_29] {strides = array<i32: 2, 1>} : memref<24x16xf32, #tpu.memory_space<vmem>>, vector<8x16xf32>
    %c7 = arith.constant 7 : index
    %c0_30 = arith.constant 0 : index
    %25 = tpu.strided_load %arg8[%c7, %c0_30] {strides = array<i32: 2, 1>} : memref<24x16xf32, #tpu.memory_space<vmem>>, vector<8x16xf32>
    %c8 = arith.constant 8 : index
    %c0_31 = arith.constant 0 : index
    %26 = tpu.strided_load %arg8[%c8, %c0_31] {strides = array<i32: 2, 1>} : memref<24x16xf32, #tpu.memory_space<vmem>>, vector<8x16xf32>
    %27 = vector.extract_strided_slice %21 {offsets = [0, 0], sizes = [8, 4], strides = [1, 1]} : vector<8x16xf32> to vector<8x4xf32>
    %28 = vector.extract_strided_slice %22 {offsets = [0, 0], sizes = [8, 4], strides = [1, 1]} : vector<8x16xf32> to vector<8x4xf32>
    %29 = vector.extract_strided_slice %23 {offsets = [0, 0], sizes = [8, 4], strides = [1, 1]} : vector<8x16xf32> to vector<8x4xf32>
    %30 = vector.extract_strided_slice %20 {offsets = [0, 4], sizes = [8, 4], strides = [1, 1]} : vector<8x16xf32> to vector<8x4xf32>
    %31 = vector.extract_strided_slice %21 {offsets = [0, 4], sizes = [8, 4], strides = [1, 1]} : vector<8x16xf32> to vector<8x4xf32>
    %32 = vector.extract_strided_slice %22 {offsets = [0, 4], sizes = [8, 4], strides = [1, 1]} : vector<8x16xf32> to vector<8x4xf32>
    %33 = vector.extract_strided_slice %23 {offsets = [0, 4], sizes = [8, 4], strides = [1, 1]} : vector<8x16xf32> to vector<8x4xf32>
    %34 = vector.extract_strided_slice %24 {offsets = [0, 4], sizes = [8, 4], strides = [1, 1]} : vector<8x16xf32> to vector<8x4xf32>
    %35 = vector.extract_strided_slice %19 {offsets = [0, 8], sizes = [8, 4], strides = [1, 1]} : vector<8x16xf32> to vector<8x4xf32>
    %36 = vector.extract_strided_slice %20 {offsets = [0, 8], sizes = [8, 4], strides = [1, 1]} : vector<8x16xf32> to vector<8x4xf32>
    %37 = vector.extract_strided_slice %21 {offsets = [0, 8], sizes = [8, 4], strides = [1, 1]} : vector<8x16xf32> to vector<8x4xf32>
    %38 = vector.extract_strided_slice %22 {offsets = [0, 8], sizes = [8, 4], strides = [1, 1]} : vector<8x16xf32> to vector<8x4xf32>
    %39 = vector.extract_strided_slice %23 {offsets = [0, 8], sizes = [8, 4], strides = [1, 1]} : vector<8x16xf32> to vector<8x4xf32>
    %40 = vector.extract_strided_slice %24 {offsets = [0, 8], sizes = [8, 4], strides = [1, 1]} : vector<8x16xf32> to vector<8x4xf32>
    %41 = vector.extract_strided_slice %25 {offsets = [0, 8], sizes = [8, 4], strides = [1, 1]} : vector<8x16xf32> to vector<8x4xf32>
    %42 = vector.extract_strided_slice %18 {offsets = [0, 12], sizes = [8, 4], strides = [1, 1]} : vector<8x16xf32> to vector<8x4xf32>
    %43 = vector.extract_strided_slice %19 {offsets = [0, 12], sizes = [8, 4], strides = [1, 1]} : vector<8x16xf32> to vector<8x4xf32>
    %44 = vector.extract_strided_slice %20 {offsets = [0, 12], sizes = [8, 4], strides = [1, 1]} : vector<8x16xf32> to vector<8x4xf32>
    %45 = vector.extract_strided_slice %21 {offsets = [0, 12], sizes = [8, 4], strides = [1, 1]} : vector<8x16xf32> to vector<8x4xf32>
    %46 = vector.extract_strided_slice %22 {offsets = [0, 12], sizes = [8, 4], strides = [1, 1]} : vector<8x16xf32> to vector<8x4xf32>
    %47 = vector.extract_strided_slice %23 {offsets = [0, 12], sizes = [8, 4], strides = [1, 1]} : vector<8x16xf32> to vector<8x4xf32>
    %48 = vector.extract_strided_slice %24 {offsets = [0, 12], sizes = [8, 4], strides = [1, 1]} : vector<8x16xf32> to vector<8x4xf32>
    %49 = vector.extract_strided_slice %25 {offsets = [0, 12], sizes = [8, 4], strides = [1, 1]} : vector<8x16xf32> to vector<8x4xf32>
    %50 = vector.extract_strided_slice %26 {offsets = [0, 12], sizes = [8, 4], strides = [1, 1]} : vector<8x16xf32> to vector<8x4xf32>
    %51 = tpu.concatenate %27, %28, %29, %30, %31, %32, %33, %34, %35, %36, %37, %38, %39, %40, %41, %42 in 1 : vector<8x4xf32>, vector<8x4xf32>, vector<8x4xf32>, vector<8x4xf32>, vector<8x4xf32>, vector<8x4xf32>, vector<8x4xf32>, vector<8x4xf32>, vector<8x4xf32>, vector<8x4xf32>, vector<8x4xf32>, vector<8x4xf32>, vector<8x4xf32>, vector<8x4xf32>, vector<8x4xf32>, vector<8x4xf32> -> vector<8x64xf32>
    %52 = tpu.concatenate %43, %44, %45, %46, %47, %48, %49, %50, %17 in 1 : vector<8x4xf32>, vector<8x4xf32>, vector<8x4xf32>, vector<8x4xf32>, vector<8x4xf32>, vector<8x4xf32>, vector<8x4xf32>, vector<8x4xf32>, vector<8x8xf32> -> vector<8x40xf32>
    %53 = tpu.concatenate %51, %52 in 1 : vector<8x64xf32>, vector<8x40xf32> -> vector<8x104xf32>
    %c0_32 = arith.constant 0 : index
    %c0_33 = arith.constant 0 : index
    %54 = vector.load %arg4[%c0_32, %c0_33] : memref<104x128xf32, #tpu.memory_space<vmem>>, vector<104x128xf32>
    %cst_34 = arith.constant dense<0.000000e+00> : vector<8x128xf32>
    %55 = tpu.matmul %53, %54, %cst_34 {dimension_numbers = #tpu.dot_dimension_numbers<[1], [0], [0], [1], [0, 0, 1, 1], [], []>} : vector<8x104xf32>, vector<104x128xf32>, vector<8x128xf32> -> vector<8x128xf32>
    %c0_35 = arith.constant 0 : index
    %c0_36 = arith.constant 0 : index
    %56 = vector.load %arg5[%c0_35, %c0_36] : memref<1x128xf32, #tpu.memory_space<vmem>>, vector<1x128xf32>
    %57 = vector.broadcast %56 : vector<1x128xf32> to vector<8x128xf32>
    %58 = arith.addf %55, %57 : vector<8x128xf32>
    %c0_37 = arith.constant 0 : index
    %c0_38 = arith.constant 0 : index
    %c0_39 = arith.constant 0 : index
    %59 = vector.load %arg6[%c0_37, %c0_38, %c0_39] : memref<1x8x128xf32, #tpu.memory_space<vmem>>, vector<1x8x128xf32>
    %60 = vector.shape_cast %59 : vector<1x8x128xf32> to vector<8x128xf32>
    %61 = vector.shape_cast %58 : vector<8x128xf32> to vector<1x8x128xf32>
    tpu.vector_store %arg6[%c0_37, %c0_38, %c0_39], %61 {strides = array<i32>} : memref<1x8x128xf32, #tpu.memory_space<vmem>>, vector<1x8x128xf32>,
    %cst_40 = arith.constant dense<0.000000e+00> : vector<128xf32>
    %62 = vector.multi_reduction <add>, %58, %cst_40 [0] : vector<8x128xf32> to vector<128xf32>
    %63 = vector.shape_cast %62 : vector<128xf32> to vector<1x128xf32>
    %64 = arith.mulf %58, %58 : vector<8x128xf32>
    %cst_41 = arith.constant dense<0.000000e+00> : vector<128xf32>
    %65 = vector.multi_reduction <add>, %64, %cst_41 [0] : vector<8x128xf32> to vector<128xf32>
    %66 = vector.shape_cast %65 : vector<128xf32> to vector<1x128xf32>
    %67 = tpu.concatenate %63, %66 in 0 : vector<1x128xf32>, vector<1x128xf32> -> vector<2x128xf32>
    %c0_i32 = arith.constant 0 : i32
    %68 = arith.cmpi eq, %arg0, %c0_i32 : i32
    %69 = arith.extui %68 : i1 to i32
    %c0_i32_42 = arith.constant 0 : i32
    %70 = arith.cmpi ne, %69, %c0_i32_42 : i32
    scf.if %70 {
      %cst_47 = arith.constant 0.000000e+00 : f32
      %74 = vector.broadcast %cst_47 : f32 to vector<2x128xf32>
      %c0_48 = arith.constant 0 : index
      %c0_49 = arith.constant 0 : index
      %75 = vector.load %arg7[%c0_48, %c0_49] : memref<2x128xf32, #tpu.memory_space<vmem>>, vector<2x128xf32>
      tpu.vector_store %arg7[%c0_48, %c0_49], %74 {strides = array<i32>} : memref<2x128xf32, #tpu.memory_space<vmem>>, vector<2x128xf32>,
    } else {
    }
    %c0_43 = arith.constant 0 : index
    %c0_44 = arith.constant 0 : index
    %71 = vector.load %arg7[%c0_43, %c0_44] : memref<2x128xf32, #tpu.memory_space<vmem>>, vector<2x128xf32>
    %72 = arith.addf %71, %67 : vector<2x128xf32>
    %c0_45 = arith.constant 0 : index
    %c0_46 = arith.constant 0 : index
    %73 = vector.load %arg7[%c0_45, %c0_46] : memref<2x128xf32, #tpu.memory_space<vmem>>, vector<2x128xf32>
    tpu.vector_store %arg7[%c0_45, %c0_46], %72 {strides = array<i32>} : memref<2x128xf32, #tpu.memory_space<vmem>>, vector<2x128xf32>,
    return
  }
  func.func @transform_0(%arg0: i32) -> (i32, i32, i32) {
    %c0_i32 = arith.constant 0 : i32
    %c0_i32_0 = arith.constant 0 : i32
    %c0_i32_1 = arith.constant 0 : i32
    return %arg0, %c0_i32, %c0_i32_0 : i32, i32, i32
  }
  func.func @transform_1(%arg0: i32) -> (i32, i32) {
    %c0_i32 = arith.constant 0 : i32
    %c0_i32_0 = arith.constant 0 : i32
    %c0_i32_1 = arith.constant 0 : i32
    return %c0_i32, %c0_i32_0 : i32, i32
  }
  func.func @transform_2(%arg0: i32) -> (i32, i32) {
    %c0_i32 = arith.constant 0 : i32
    %c0_i32_0 = arith.constant 0 : i32
    %c0_i32_1 = arith.constant 0 : i32
    return %c0_i32, %c0_i32_0 : i32, i32
  }
  func.func @transform_3(%arg0: i32) -> (i32, i32) {
    %c0_i32 = arith.constant 0 : i32
    %c0_i32_0 = arith.constant 0 : i32
    %c0_i32_1 = arith.constant 0 : i32
    return %c0_i32, %c0_i32_0 : i32, i32
  }
  func.func @transform_4(%arg0: i32) -> (i32, i32) {
    %c0_i32 = arith.constant 0 : i32
    %c0_i32_0 = arith.constant 0 : i32
    %c0_i32_1 = arith.constant 0 : i32
    return %c0_i32, %c0_i32_0 : i32, i32
  }
  func.func @transform_5(%arg0: i32) -> (i32, i32, i32) {
    %c0_i32 = arith.constant 0 : i32
    %c0_i32_0 = arith.constant 0 : i32
    %c0_i32_1 = arith.constant 0 : i32
    return %arg0, %c0_i32, %c0_i32_0 : i32, i32, i32
  }
  func.func @transform_6(%arg0: i32) -> (i32, i32) {
    %c0_i32 = arith.constant 0 : i32
    %c0_i32_0 = arith.constant 0 : i32
    %c0_i32_1 = arith.constant 0 : i32
    return %c0_i32, %c0_i32_0 : i32, i32
  }
}

</mosaic_0001>

<llo_original>
// kernel: tpu_custom_call.1
$region0: #{tpu_custom_call.1}
  #allocation0 [shape = 'u32[]', space=smem, size = 0x4, offset = 0x4, fixed_abs, tag = 'smem constant byte address 0x4 - core index']
  #allocation1 [shape = 'u32[144,128]{1,0:T(1,128)}', space=vmem, size = 0x12000, scoped, tag = 'internal scratch']
  #allocation2 [shape = 'f32[24,16]{1,0:T(8,128)}', space=vmem, size = 0x3000, scoped, tag = 'scratch operand']
  #allocation3 [shape = 'f32[18,8]{1,0:T(8,128)}', space=vmem, size = 0x3000, scoped, tag = 'scratch operand']
  %s0 = inlined_call_operand.vmem [shape: f32[2,16,8], index: 0, kind: input, shape index: {}]
  %s1 = inlined_call_operand.vmem [shape: f32[8,16], index: 1, kind: input, shape index: {}]
  %s2 = inlined_call_operand.vmem [shape: f32[1,16], index: 2, kind: input, shape index: {}]
  %s3 = inlined_call_operand.hbm [shape: f32[104,128], index: 3, kind: input, shape index: {}]
  %s4 = inlined_call_operand.vmem [shape: f32[1,128], index: 4, kind: input, shape index: {}]
  %s5 = inlined_call_operand.hbm [shape: f32[2,8,128], index: 5, kind: output, shape index: {0}]
  %s6 = inlined_call_operand.hbm [shape: f32[2,128], index: 6, kind: output, shape index: {1}]
  %7 = xla_tuple %s5, %s6
  %s8 = sld [smem:[#allocation0]]
  $region69: #{tpu_custom_call.1} parent=0
    _
  %s10 = ssub.s32 1, %s8
  %s11 = scalar_select 0, %s10, %s8
  $region1: #{tpu_custom_call.1} parent=0
    #allocation4 [shape = 'u8[53248]{0}', space=vmem, size = 0xd000, scoped, tag = 'input window, operand 3, single buffered']
    #allocation5 [shape = 's32[2]{0}', space=sflag, size = 0x8, scoped, tag = 'scoped memory for tpu_custom_call.1']
    #allocation6 [shape = 's32[2]{0}', space=sflag, size = 0x8, scoped, tag = 'scoped memory for tpu_custom_call.1']
    #allocation7 [shape = 'u8[8192]{0}', space=vmem, size = 0x2000, scoped, tag = 'output window, operand 0']
    #allocation8 [shape = 'u8[1024]{0}', space=vmem, size = 0x400, scoped, tag = 'output window, operand 1, single buffered']
    #allocation9 [shape = 's32[1]{0}', space=sflag, size = 0x4, scoped, tag = 'scoped memory for tpu_custom_call.1']
    %12 = vsyncpa [#allocation5], 0
    %13 = vsyncpa [#allocation6], 0
    %s14 = scalar_lea.sflag [#allocation6], 1
    %15 = vsyncpa %s14, 0
    %16 = vsyncpa [#allocation9], 0
    loop: start=0, step=1, limit=4
    $region2: #{tpu_custom_call.1} parent=1 // loop_pre_header
      _
    $region3: #{tpu_custom_call.1} parent=1 // loop_header
      %s18 = sphi 0, %s22
      %p19 = scmp.ge.s32.totalorder %s18, 4
      %s28 = sphi 0, %s30
      %s31 = sphi 0, %s28
      %s32 = sphi 0, %s31
      %s48 = sphi 0, %s32
      %s52 = sphi 0, %s52
      %s54 = sphi 0, %s52
      %s55 = sphi 0, %s54
      %s69 = sphi 0, %s55
      %s73 = sphi 0, %s73
      %s75 = sphi 0, %s73
      %s76 = sphi 0, %s75
      %s90 = sphi 0, %s76
      %s94 = sphi 0, %s94
      %s96 = sphi 0, %s94
      %s97 = sphi 0, %s96
      %s111 = sphi 0, %s97
      %s115 = sphi 0, %s115
      %s117 = sphi 0, %s115
      %s118 = sphi 0, %s117
      %s132 = sphi 0, %s118
      %s138 = sphi 0, %s140
      %s141 = sphi 0, %s138
      %s142 = sphi 0, %s141
      %s158 = sphi 0, %s142
      %s162 = sphi 0, %s162
      %s164 = sphi 0, %s162
      %s165 = sphi 0, %s164
      %s179 = sphi 0, %s165
    $region4: #{tpu_custom_call.1} parent=1 // loop_header_branch
      %21 = sbr.rel (%p19) target = $region8
    $region5: #{tpu_custom_call.1} parent=1 // loop_body
      %s23 = ssub.s32 %s18, 1
      %s24 = ssub.s32 %s18, 2
      %s25 = sadd.s32 %s18, 1
      %s26 = ssub.s32 %s18, %s25
      %p27 = scmp.eq.s32.totalorder %s26, 0
      %s29 = sadd.s32 %s28, 1
      %s30 = scalar_select %p27, %s28, %s29
      %p33 = pneg %p27
      %p34 = scmp.eq.s32.totalorder %s18, 1
      %p35 = por %p33, %p34
      %p36 = scmp.ne.s32.totalorder %s28, %s31
      %p37 = scmp.eq.s32.totalorder %s18, 0
      %p38 = por %p36, %p37
      %p39 = scmp.ne.s32.totalorder %s28, %s31
      %p40 = scmp.eq.s32.totalorder %s23, 1
      %p41 = por %p39, %p40
      %p42 = scmp.ne.s32.totalorder %s31, %s32
      %p43 = scmp.eq.s32.totalorder %s23, 0
      %p44 = por %p42, %p43
      %p45 = scmp.ne.s32.totalorder %s31, %s32
      %p46 = scmp.eq.s32.totalorder %s24, 1
      %p47 = por %p45, %p46
      %p49 = scmp.ne.s32.totalorder %s32, %s48
      %p50 = scmp.eq.s32.totalorder %s24, 0
      %p51 = por %p49, %p50
      %s53 = sadd.s32 %s52, 1
      %p56 = scmp.eq.s32.totalorder %s18, 1
      %p57 = scmp.ne.s32.totalorder %s52, %s54
      %p58 = scmp.eq.s32.totalorder %s18, 0
      %p59 = por %p57, %p58
      %p60 = scmp.ne.s32.totalorder %s52, %s54
      %p61 = scmp.eq.s32.totalorder %s23, 1
      %p62 = por %p60, %p61
      %p63 = scmp.ne.s32.totalorder %s54, %s55
      %p64 = scmp.eq.s32.totalorder %s23, 0
      %p65 = por %p63, %p64
      %p66 = scmp.ne.s32.totalorder %s54, %s55
      %p67 = scmp.eq.s32.totalorder %s24, 1
      %p68 = por %p66, %p67
      %p70 = scmp.ne.s32.totalorder %s55, %s69
      %p71 = scmp.eq.s32.totalorder %s24, 0
      %p72 = por %p70, %p71
      %s74 = sadd.s32 %s73, 1
      %p77 = scmp.eq.s32.totalorder %s18, 1
      %p78 = scmp.ne.s32.totalorder %s73, %s75
      %p79 = scmp.eq.s32.totalorder %s18, 0
      %p80 = por %p78, %p79
      %p81 = scmp.ne.s32.totalorder %s73, %s75
      %p82 = scmp.eq.s32.totalorder %s23, 1
      %p83 = por %p81, %p82
      %p84 = scmp.ne.s32.totalorder %s75, %s76
      %p85 = scmp.eq.s32.totalorder %s23, 0
      %p86 = por %p84, %p85
      %p87 = scmp.ne.s32.totalorder %s75, %s76
      %p88 = scmp.eq.s32.totalorder %s24, 1
      %p89 = por %p87, %p88
      %p91 = scmp.ne.s32.totalorder %s76, %s90
      %p92 = scmp.eq.s32.totalorder %s24, 0
      %p93 = por %p91, %p92
      %s95 = sadd.s32 %s94, 1
      %p98 = scmp.eq.s32.totalorder %s18, 1
      %p99 = scmp.ne.s32.totalorder %s94, %s96
      %p100 = scmp.eq.s32.totalorder %s18, 0
      %p101 = por %p99, %p100
      %p102 = scmp.ne.s32.totalorder %s94, %s96
      %p103 = scmp.eq.s32.totalorder %s23, 1
      %p104 = por %p102, %p103
      %p105 = scmp.ne.s32.totalorder %s96, %s97
      %p106 = scmp.eq.s32.totalorder %s23, 0
      %p107 = por %p105, %p106
      %p108 = scmp.ne.s32.totalorder %s96, %s97
      %p109 = scmp.eq.s32.totalorder %s24, 1
      %p110 = por %p108, %p109
      %p112 = scmp.ne.s32.totalorder %s97, %s111
      %p113 = scmp.eq.s32.totalorder %s24, 0
      %p114 = por %p112, %p113
      %s116 = sadd.s32 %s115, 1
      %p119 = scmp.eq.s32.totalorder %s18, 1
      %p120 = scmp.ne.s32.totalorder %s115, %s117
      %p121 = scmp.eq.s32.totalorder %s18, 0
      %p122 = por %p120, %p121
      %p123 = scmp.ne.s32.totalorder %s115, %s117
      %p124 = scmp.eq.s32.totalorder %s23, 1
      %p125 = por %p123, %p124
      %p126 = scmp.ne.s32.totalorder %s117, %s118
      %p127 = scmp.eq.s32.totalorder %s23, 0
      %p128 = por %p126, %p127
      %p129 = scmp.ne.s32.totalorder %s117, %s118
      %p130 = scmp.eq.s32.totalorder %s24, 1
      %p131 = por %p129, %p130
      %p133 = scmp.ne.s32.totalorder %s118, %s132
      %p134 = scmp.eq.s32.totalorder %s24, 0
      %p135 = por %p133, %p134
      %s136 = ssub.s32 %s18, %s25
      %p137 = scmp.eq.s32.totalorder %s136, 0
      %s139 = sadd.s32 %s138, 1
      %s140 = scalar_select %p137, %s138, %s139
      %p143 = pneg %p137
      %p144 = scmp.eq.s32.totalorder %s18, 1
      %p145 = por %p143, %p144
      %p146 = scmp.ne.s32.totalorder %s138, %s141
      %p147 = scmp.eq.s32.totalorder %s18, 0
      %p148 = por %p146, %p147
      %p149 = scmp.ne.s32.totalorder %s138, %s141
      %p150 = scmp.eq.s32.totalorder %s23, 1
      %p151 = por %p149, %p150
      %p152 = scmp.ne.s32.totalorder %s141, %s142
      %p153 = scmp.eq.s32.totalorder %s23, 0
      %p154 = por %p152, %p153
      %p155 = scmp.ne.s32.totalorder %s141, %s142
      %p156 = scmp.eq.s32.totalorder %s24, 1
      %p157 = por %p155, %p156
      %p159 = scmp.ne.s32.totalorder %s142, %s158
      %p160 = scmp.eq.s32.totalorder %s24, 0
      %p161 = por %p159, %p160
      %s163 = sadd.s32 %s162, 1
      %p166 = scmp.eq.s32.totalorder %s18, 1
      %p167 = scmp.ne.s32.totalorder %s162, %s164
      %p168 = scmp.eq.s32.totalorder %s18, 0
      %p169 = por %p167, %p168
      %p170 = scmp.ne.s32.totalorder %s162, %s164
      %p171 = scmp.eq.s32.totalorder %s23, 1
      %p172 = por %p170, %p171
      %p173 = scmp.ne.s32.totalorder %s164, %s165
      %p174 = scmp.eq.s32.totalorder %s23, 0
      %p175 = por %p173, %p174
      %p176 = scmp.ne.s32.totalorder %s164, %s165
      %p177 = scmp.eq.s32.totalorder %s24, 1
      %p178 = por %p176, %p177
      %p180 = scmp.ne.s32.totalorder %s165, %s179
      %p181 = scmp.eq.s32.totalorder %s24, 0
      %p182 = por %p180, %p181
      %p183 = scmp.le.s32.totalorder 1, %s18
      %p184 = scmp.lt.s32.totalorder %s18, 3
      %p185 = pnand %p183, %p184
      %p186 = pneg %p185
      // Predicated region
      $region9: #{tpu_custom_call.1} parent=5 // pred_check
        _
      $region10: #{tpu_custom_call.1} parent=5 // pred_check_branch
        %188 = sbr.rel (%p185) target = $region12
      $region11: #{tpu_custom_call.1} parent=5 // pred_region
        %s189 = ssub.s32 %s18, 1
        // Predicated region
        $region13: #{tpu_custom_call.1} parent=11 // pred_check
          %p190 = pneg %p65
        $region14: #{tpu_custom_call.1} parent=11 // pred_check_branch
          %192 = sbr.rel (%p190) target = $region16
        $region15: #{tpu_custom_call.1} parent=11 // pred_region
          _
        $region16: #{tpu_custom_call.1} parent=11 // pred_fallthru
          _
        // Predicated region
        $region17: #{tpu_custom_call.1} parent=11 // pred_check
          %p193 = pneg %p86
        $region18: #{tpu_custom_call.1} parent=11 // pred_check_branch
          %195 = sbr.rel (%p193) target = $region20
        $region19: #{tpu_custom_call.1} parent=11 // pred_region
          _
        $region20: #{tpu_custom_call.1} parent=11 // pred_fallthru
          _
        // Predicated region
        $region21: #{tpu_custom_call.1} parent=11 // pred_check
          %p196 = pneg %p107
        $region22: #{tpu_custom_call.1} parent=11 // pred_check_branch
          %198 = sbr.rel (%p196) target = $region24
        $region23: #{tpu_custom_call.1} parent=11 // pred_region
          %s200 = ssub.s32 1664, 1664
          %201 = vsyncadd [#allocation5], %s200
          %s202 = sshll.u32 [#allocation4], 4
          %s203 = int_to_ptr.vmem [resolvable:$true] %s202
          %208 = dma.hbm_to_vmem [thread:$0]  %s3, 1664, %s203, [#allocation5], 128, 128, 8
        $region24: #{tpu_custom_call.1} parent=11 // pred_fallthru
          _
        // Predicated region
        $region25: #{tpu_custom_call.1} parent=11 // pred_check
          %p209 = pneg %p128
        $region26: #{tpu_custom_call.1} parent=11 // pred_check_branch
          %211 = sbr.rel (%p209) target = $region28
        $region27: #{tpu_custom_call.1} parent=11 // pred_region
          _
        $region28: #{tpu_custom_call.1} parent=11 // pred_fallthru
          _
      $region12: #{tpu_custom_call.1} parent=5 // pred_fallthru
        _
      %p212 = scmp.lt.s32.totalorder %s18, 2
      // Predicated region
      $region29: #{tpu_custom_call.1} parent=5 // pred_check
        %p213 = pneg %p212
      $region30: #{tpu_custom_call.1} parent=5 // pred_check_branch
        %215 = sbr.rel (%p213) target = $region32
      $region31: #{tpu_custom_call.1} parent=5 // pred_region
        // Predicated region
        $region33: #{tpu_custom_call.1} parent=31 // pred_check
          %p216 = pneg %p38
        $region34: #{tpu_custom_call.1} parent=31 // pred_check_branch
          %218 = sbr.rel (%p216) target = $region36
        $region35: #{tpu_custom_call.1} parent=31 // pred_region
          %p219 = scmp.lt.s32.totalorder %s18, 1
          %s220 = scalar_select %p219, %s18, 1
          %s221 = smul.addr %s220, 2
          %s222 = smul.addr %s221, 8
          %s223 = scalar_lea.vmem %s0, %s222
        $region36: #{tpu_custom_call.1} parent=31 // pred_fallthru
          _
      $region32: #{tpu_custom_call.1} parent=5 // pred_fallthru
        _
      %p224 = scmp.le.s32.totalorder 1, %s18
      %p225 = scmp.lt.s32.totalorder %s18, 3
      %p226 = pnand %p224, %p225
      %p227 = pneg %p226
      // Predicated region
      $region37: #{tpu_custom_call.1} parent=5 // pred_check
        _
      $region38: #{tpu_custom_call.1} parent=5 // pred_check_branch
        %229 = sbr.rel (%p226) target = $region40
      $region39: #{tpu_custom_call.1} parent=5 // pred_region
        %s230 = ssub.s32 %s18, 1
        // Predicated region
        $region41: #{tpu_custom_call.1} parent=39 // pred_check
          %p231 = pneg %p107
        $region42: #{tpu_custom_call.1} parent=39 // pred_check_branch
          %233 = sbr.rel (%p231) target = $region44
        $region43: #{tpu_custom_call.1} parent=39 // pred_region
          %234 = dma.done [#allocation5], 1664
        $region44: #{tpu_custom_call.1} parent=39 // pred_fallthru
          _
        %p235 = scmp.lt.s32.totalorder %s23, 1
        %s236 = scalar_select %p235, %s23, 1
        %s237 = smul.addr %s236, 2
        %s238 = smul.addr %s237, 8
        %s239 = scalar_lea.vmem %s0, %s238
        %p240 = pneg %p44
        %p241 = pneg %p41
        %p242 = pneg %p65
        %p243 = pneg %p62
        %p244 = pneg %p86
        %p245 = pneg %p83
        %p246 = pneg %p107
        %p247 = pneg %p104
        %p248 = pneg %p128
        %p249 = pneg %p125
        %p250 = pneg %p154
        %p251 = pneg %p151
        %s252 = sand.u32 %s141, 1
        %s253 = scalar_lea.sflag [#allocation6], %s252
        %s254 = sand.u32 %s141, 1
        %s255 = smul.addr %s254, 8
        %s256 = scalar_lea.vmem [#allocation7], %s255
        %p257 = pneg %p175
        %p258 = pneg %p172
        %p259 = scmp.lt.s32.totalorder %s23, 1
        %s260 = scalar_select %p259, %s23, 1
        %s261 = smul.addr %s260, 2
        %s262 = smul.addr %s261, 8
        %s263 = scalar_lea.vmem %s0, %s262
        %v264 = vld [vmem:[%s263] sm:$0xff]
        %v265 = vld [vmem:[%s263 + $0x8] sm:$0xff]
        %v266 = vld [vmem:[%s1] sm:$0xff]
        %v267 = vld [vmem:[%s2] sm:$0x1]
        %v269 = vlaneseq
        %v270 = vshrl.u32 %v269, 7
        %v271 = vsub.s32 0, %v270
        %v272 = vrot.slane %v267, %v271
        %vm274 = vcmask 64512
        %v276 = vsel %vm274, %v264, 0
        %v279 = vsel %vm274, %v265, 0
        %281 = vmatprep.subr.mxu0 0.0
        %282 = vmatpush1.msra.mxu0 %v266
        %283 = vmatprep.subr.mxu0 0.0
        %284 = vmatpush1.msra.mxu0 0.0
        %285 = vmatprep.subr.mxu0 0.0
        %286 = vmatpush1.msra.mxu0 0.0
        %287 = vmatprep.subr.mxu0 0.0
        %288 = vmatpush1.msra.mxu0 0.0
        %289 = vmatprep.subr.mxu0 0.0
        %290 = vmatpush1.msra.mxu0 0.0
        %291 = vmatprep.subr.mxu0 0.0
        %292 = vmatpush1.msra.mxu0 0.0
        %293 = vmatprep.subr.mxu0 0.0
        %294 = vmatpush1.msra.mxu0 0.0
        %295 = vmatprep.subr.mxu0 0.0
        %296 = vmatpush1.msra.mxu0 0.0
        %297 = vmatprep.subr.mxu0 0.0
        %298 = vmatpush1.msra.mxu0 0.0
        %299 = vmatprep.subr.mxu0 0.0
        %300 = vmatpush1.msra.mxu0 0.0
        %301 = vmatprep.subr.mxu0 0.0
        %302 = vmatpush1.msra.mxu0 0.0
        %303 = vmatprep.subr.mxu0 0.0
        %304 = vmatpush1.msra.mxu0 0.0
        %305 = vmatprep.subr.mxu0 0.0
        %306 = vmatpush1.msra.mxu0 0.0
        %307 = vmatprep.subr.mxu0 0.0
        %308 = vmatpush1.msra.mxu0 0.0
        %309 = vmatprep.subr.mxu0 0.0
        %310 = vmatpush1.msra.mxu0 0.0
        %311 = vmatprep.subr.mxu0 0.0
        %312 = vmatpush1.msra.mxu0 0.0
        %313 = vmatprep.subr.mxu0 0.0
        %314 = vmatpush1.msra.mxu0 0.0
        %315 = vmatprep.subr.mxu0 0.0
        %316 = vmatpush1.msra.mxu0 0.0
        %317 = vmatprep.subr.mxu0 0.0
        %318 = vmatpush1.msra.mxu0 0.0
        %319 = vmatprep.subr.mxu0 0.0
        %320 = vmatpush1.msra.mxu0 0.0
        %321 = vmatprep.subr.mxu0 0.0
        %322 = vmatpush1.msra.mxu0 0.0
        %323 = vmatprep.subr.mxu0 0.0
        %324 = vmatpush1.msra.mxu0 0.0
        %325 = vmatprep.subr.mxu0 0.0
        %326 = vmatpush1.msra.mxu0 0.0
        %327 = vmatprep.subr.mxu0 0.0
        %328 = vmatpush1.msra.mxu0 0.0
        %329 = vmatprep.subr.mxu0 0.0
        %330 = vmatpush1.msra.mxu0 0.0
        %331 = vmatprep.subr.mxu0 0.0
        %332 = vmatpush1.msra.mxu0 0.0
        %333 = vmatprep.subr.mxu0 0.0
        %334 = vmatpush1.msra.mxu0 0.0
        %335 = vmatprep.subr.mxu0 0.0
        %336 = vmatpush1.msra.mxu0 0.0
        %337 = vmatprep.subr.mxu0 0.0
        %338 = vmatpush1.msra.mxu0 0.0
        %339 = vmatprep.subr.mxu0 0.0
        %340 = vmatpush1.msra.mxu0 0.0
        %341 = vmatprep.subr.mxu0 0.0
        %342 = vmatpush1.msra.mxu0 0.0
        %343 = vmatprep.subr.mxu0 0.0
        %344 = vmatpush1.msra.mxu0 0.0
        %345 = vmatprep.mubr.f32.mxu0 0.0
        %346 = vmatmul.mubr.f32.gmra.mrb[0].mxu0 %v276
        %v347 = vpop.f32.mrb[0].mxu0
        %v348 = vadd.f32 %v272, %v347
        %v349 = vpop.f32.mrb[0].mxu0
        %350 = vmatprep.mubr.f32.mxu0 0.0
        %351 = vmatmul.mubr.f32.gmra.mrb[0].mxu0 %v279
        %v352 = vpop.f32.mrb[0].mxu0
        %v353 = vadd.f32 %v272, %v352
        %v354 = vpop.f32.mrb[0].mxu0
        %355 = vdwg.mxu0
        %vm356 = vcmask 130048
        %357 = vst.msk [vmem:[#allocation2] sm:$0xff] %vm356, 0.0
        %358 = vst.msk [vmem:[#allocation2 + $0x8] sm:$0xff] %vm356, 0.0
        %359 = vst.msk [vmem:[#allocation2 + $0x10] sm:$0xff] %vm356, 0.0
        %360 = vst.msk [vmem:[#allocation2 + $0x4] sm:$0xff] %vm356, %v348
        %361 = vst.msk [vmem:[#allocation2 + $0xc] sm:$0xff] %vm356, %v353
        %362 = vst.msk [vmem:[#allocation3] sm:$0xff] %vm274, -1e+30
        %363 = vst.msk [vmem:[#allocation3 + $0x8] sm:$0xff] %vm274, -1e+30
        %vm364 = vcmask 58368
        %365 = vst.msk [vmem:[#allocation3 + $0x10] sm:$0x3] %vm364, -1e+30
        %366 = vst.msk [vmem:[#allocation3 + $0x1] sm:$0xff] %vm274, %v264
        %367 = vst.msk [vmem:[#allocation3 + $0x9] sm:$0xff] %vm274, %v265
        %v368 = vld [vmem:[#allocation3] ss:$2 sm:$0xff]
        %s369 = scalar_lea.vmem [#allocation3], 1
        %v370 = vld [vmem:[%s369] ss:$2 sm:$0xff]
        %v371 = vmax.f32 %v368, %v370
        %s372 = scalar_lea.vmem [#allocation3], 2
        %v373 = vld [vmem:[%s372] ss:$2 sm:$0xff]
        %v374 = vmax.f32 %v371, %v373
        %v375 = vld [vmem:[#allocation2] ss:$2 sm:$0xff]
        %s376 = scalar_lea.vmem [#allocation2], 1
        %v377 = vld [vmem:[%s376] ss:$2 sm:$0xff]
        %s378 = scalar_lea.vmem [#allocation2], 2
        %v379 = vld [vmem:[%s378] ss:$2 sm:$0xff]
        %s380 = scalar_lea.vmem [#allocation2], 3
        %v381 = vld [vmem:[%s380] ss:$2 sm:$0xff]
        %s382 = scalar_lea.vmem [#allocation2], 4
        %v383 = vld [vmem:[%s382] ss:$2 sm:$0xff]
        %s384 = scalar_lea.vmem [#allocation2], 5
        %v385 = vld [vmem:[%s384] ss:$2 sm:$0xff]
        %s386 = scalar_lea.vmem [#allocation2], 6
        %v387 = vld [vmem:[%s386] ss:$2 sm:$0xff]
        %s388 = scalar_lea.vmem [#allocation2], 7
        %v389 = vld [vmem:[%s388] ss:$2 sm:$0xff]
        %s390 = scalar_lea.vmem [#allocation2], 8
        %v391 = vld [vmem:[%s390] ss:$2 sm:$0xff]
        %393 = vrot.lane.b32.xlu0 %v383, 4
        %v394 = vpop.permute.xlu0 %393
        %397 = vrot.lane.b32.xlu0 %v385, 8
        %v398 = vpop.permute.xlu0 %397
        %401 = vrot.lane.b32.xlu0 %v379, 8
        %v402 = vpop.permute.xlu0 %401
        %405 = vrot.lane.b32.xlu0 %v381, 12
        %v406 = vpop.permute.xlu0 %405
        %408 = vrot.lane.b32.xlu0 %v383, 16
        %v409 = vpop.permute.xlu0 %408
        %411 = vrot.lane.b32.xlu0 %v385, 20
        %v412 = vpop.permute.xlu0 %411
        %415 = vrot.lane.b32.xlu0 %v387, 24
        %v416 = vpop.permute.xlu0 %415
        %419 = vrot.lane.b32.xlu0 %v377, 24
        %v420 = vpop.permute.xlu0 %419
        %422 = vrot.lane.b32.xlu0 %v379, 28
        %v423 = vpop.permute.xlu0 %422
        %425 = vrot.lane.b32.xlu0 %v381, 32
        %v426 = vpop.permute.xlu0 %425
        %428 = vrot.lane.b32.xlu0 %v383, 36
        %v429 = vpop.permute.xlu0 %428
        %431 = vrot.lane.b32.xlu0 %v385, 40
        %v432 = vpop.permute.xlu0 %431
        %434 = vrot.lane.b32.xlu0 %v387, 44
        %v435 = vpop.permute.xlu0 %434
        %438 = vrot.lane.b32.xlu0 %v389, 48
        %v439 = vpop.permute.xlu0 %438
        %442 = vrot.lane.b32.xlu0 %v375, 48
        %v443 = vpop.permute.xlu0 %442
        %vm445 = vcmask 31744
        %v446 = vsel %vm445, %v381, %v394
        %v447 = vsel %vm274, %v446, %v398
        %vm448 = vcmask 97280
        %v449 = vsel %vm448, %v447, %v402
        %v450 = vsel %vm356, %v449, %v406
        %vm451 = vcmask 162816
        %v452 = vsel %vm451, %v450, %v409
        %vm453 = vcmask 195584
        %v454 = vsel %vm453, %v452, %v412
        %vm455 = vcmask 228352
        %v456 = vsel %vm455, %v454, %v416
        %vm457 = vcmask 261120
        %v458 = vsel %vm457, %v456, %v420
        %vm459 = vcmask 293888
        %v460 = vsel %vm459, %v458, %v423
        %vm461 = vcmask 326656
        %v462 = vsel %vm461, %v460, %v426
        %vm463 = vcmask 359424
        %v464 = vsel %vm463, %v462, %v429
        %vm465 = vcmask 392192
        %v466 = vsel %vm465, %v464, %v432
        %vm467 = vcmask 424960
        %v468 = vsel %vm467, %v466, %v435
        %vm469 = vcmask 457728
        %v470 = vsel %vm469, %v468, %v439
        %vm471 = vcmask 490496
        %v472 = vsel %vm471, %v470, %v443
        %473 = vrot.lane.b32.xlu0 %v377, 116
        %v474 = vpop.permute.xlu0 %473
        %476 = vrot.lane.b32.xlu0 %v379, 120
        %v477 = vpop.permute.xlu0 %476
        %479 = vrot.lane.b32.xlu0 %v381, 124
        %v480 = vpop.permute.xlu0 %479
        %482 = vrot.lane.b32.xlu0 %v385, 4
        %v483 = vpop.permute.xlu0 %482
        %485 = vrot.lane.b32.xlu0 %v387, 8
        %v486 = vpop.permute.xlu0 %485
        %488 = vrot.lane.b32.xlu0 %v389, 12
        %v489 = vpop.permute.xlu0 %488
        %492 = vrot.lane.b32.xlu0 %v391, 16
        %v493 = vpop.permute.xlu0 %492
        %496 = vrot.lane.b32.xlu0 %v374, 32
        %v497 = vpop.permute.xlu0 %496
        %v499 = vsel %vm445, %v474, %v477
        %v500 = vsel %vm274, %v499, %v480
        %v501 = vsel %vm448, %v500, %v383
        %v502 = vsel %vm356, %v501, %v483
        %v503 = vsel %vm451, %v502, %v486
        %v504 = vsel %vm453, %v503, %v489
        %v505 = vsel %vm455, %v504, %v493
        %v506 = vsel %vm457, %v505, %v497
        %508 = vrot.lane.b32.xlu0 %v506, 64
        %v509 = vpop.permute.xlu0 %508
        %vm511 = vcmask 523264
        %v512 = vsel %vm511, %v472, %v509
        %v513 = vld [vmem:[#allocation4] sm:$0xff]
        %v514 = vld [vmem:[#allocation4 + $0x8] sm:$0xff]
        %v515 = vld [vmem:[#allocation4 + $0x10] sm:$0xff]
        %v516 = vld [vmem:[#allocation4 + $0x18] sm:$0xff]
        %v517 = vld [vmem:[#allocation4 + $0x20] sm:$0xff]
        %v518 = vld [vmem:[#allocation4 + $0x28] sm:$0xff]
        %v519 = vld [vmem:[#allocation4 + $0x30] sm:$0xff]
        %v520 = vld [vmem:[#allocation4 + $0x38] sm:$0xff]
        %v521 = vld [vmem:[#allocation4 + $0x40] sm:$0xff]
        %v522 = vld [vmem:[#allocation4 + $0x48] sm:$0xff]
        %v523 = vld [vmem:[#allocation4 + $0x50] sm:$0xff]
        %v524 = vld [vmem:[#allocation4 + $0x58] sm:$0xff]
        %v525 = vld [vmem:[#allocation4 + $0x60] sm:$0xff]
        %v526 = vld [vmem:[%s4] sm:$0x1]
        %v528 = vlaneseq
        %v529 = vshrl.u32 %v528, 7
        %v530 = vsub.s32 0, %v529
        %v531 = vrot.slane %v526, %v530
        %vm533 = vcmask 850944
        %v535 = vsel %vm533, %v512, 0
        %537 = vmatprep.subr.mxu0 0.0
        %538 = vmatpush1.msra.mxu0 %v513
        %539 = vmatprep.subr.mxu0 0.0
        %540 = vmatpush1.msra.mxu0 %v514
        %541 = vmatprep.subr.mxu0 0.0
        %542 = vmatpush1.msra.mxu0 %v515
        %543 = vmatprep.subr.mxu0 0.0
        %544 = vmatpush1.msra.mxu0 %v516
        %545 = vmatprep.subr.mxu0 0.0
        %546 = vmatpush1.msra.mxu0 %v517
        %547 = vmatprep.subr.mxu0 0.0
        %548 = vmatpush1.msra.mxu0 %v518
        %549 = vmatprep.subr.mxu0 0.0
        %550 = vmatpush1.msra.mxu0 %v519
        %551 = vmatprep.subr.mxu0 0.0
        %552 = vmatpush1.msra.mxu0 %v520
        %553 = vmatprep.subr.mxu0 0.0
        %554 = vmatpush1.msra.mxu0 %v521
        %555 = vmatprep.subr.mxu0 0.0
        %556 = vmatpush1.msra.mxu0 %v522
        %557 = vmatprep.subr.mxu0 0.0
        %558 = vmatpush1.msra.mxu0 %v523
        %559 = vmatprep.subr.mxu0 0.0
        %560 = vmatpush1.msra.mxu0 %v524
        %561 = vmatprep.subr.mxu0 0.0
        %562 = vmatpush1.msra.mxu0 %v525
        %563 = vmatprep.subr.mxu0 0.0
        %564 = vmatpush1.msra.mxu0 0.0
        %565 = vmatprep.subr.mxu0 0.0
        %566 = vmatpush1.msra.mxu0 0.0
        %567 = vmatprep.subr.mxu0 0.0
        %568 = vmatpush1.msra.mxu0 0.0
        %569 = vmatprep.subr.mxu0 0.0
        %570 = vmatpush1.msra.mxu0 0.0
        %571 = vmatprep.subr.mxu0 0.0
        %572 = vmatpush1.msra.mxu0 0.0
        %573 = vmatprep.subr.mxu0 0.0
        %574 = vmatpush1.msra.mxu0 0.0
        %575 = vmatprep.subr.mxu0 0.0
        %576 = vmatpush1.msra.mxu0 0.0
        %577 = vmatprep.subr.mxu0 0.0
        %578 = vmatpush1.msra.mxu0 0.0
        %579 = vmatprep.subr.mxu0 0.0
        %580 = vmatpush1.msra.mxu0 0.0
        %581 = vmatprep.subr.mxu0 0.0
        %582 = vmatpush1.msra.mxu0 0.0
        %583 = vmatprep.subr.mxu0 0.0
        %584 = vmatpush1.msra.mxu0 0.0
        %585 = vmatprep.subr.mxu0 0.0
        %586 = vmatpush1.msra.mxu0 0.0
        %587 = vmatprep.subr.mxu0 0.0
        %588 = vmatpush1.msra.mxu0 0.0
        %589 = vmatprep.subr.mxu0 0.0
        %590 = vmatpush1.msra.mxu0 0.0
        %591 = vmatprep.subr.mxu0 0.0
        %592 = vmatpush1.msra.mxu0 0.0
        %593 = vmatprep.subr.mxu0 0.0
        %594 = vmatpush1.msra.mxu0 0.0
        %595 = vmatprep.subr.mxu0 0.0
        %596 = vmatpush1.msra.mxu0 0.0
        %597 = vmatprep.subr.mxu0 0.0
        %598 = vmatpush1.msra.mxu0 0.0
        %599 = vmatprep.subr.mxu0 0.0
        %600 = vmatpush1.msra.mxu0 0.0
        %601 = vmatprep.mubr.f32.mxu0 0.0
        %602 = vmatmul.mubr.f32.gmra.mrb[0].mxu0 %v535
        %v603 = vpop.f32.mrb[0].mxu0
        %v604 = vadd.f32 %v531, %v603
        %v605 = vpop.f32.mrb[0].mxu0
        %606 = vdwg.mxu0
        %607 = vst [vmem:[%s256] sm:$0xff] %v604
        %v608 = vrot.slane %v604, 4
        %v609 = vadd.f32 %v604, %v608
        %v610 = vrot.slane %v609, 2
        %v611 = vadd.f32 %v609, %v610
        %v612 = vrot.slane %v611, 1
        %v613 = vadd.f32 %v611, %v612
        %v614 = vmul.f32 %v604, %v604
        %v615 = vrot.slane %v614, 4
        %v616 = vadd.f32 %v614, %v615
        %v617 = vrot.slane %v616, 2
        %v618 = vadd.f32 %v616, %v617
        %v619 = vrot.slane %v618, 1
        %v620 = vadd.f32 %v618, %v619
        %vm621 = vcmask 1040384
        %v622 = vsel %vm621, %v613, %v620
        %p623 = scmp.eq.s32.totalorder %s23, 0
        // Predicated region
        $region45: #{tpu_custom_call.1} parent=39 // pred_check
          %p624 = pneg %p623
        $region46: #{tpu_custom_call.1} parent=39 // pred_check_branch
          %626 = sbr.rel (%p624) target = $region48
        $region47: #{tpu_custom_call.1} parent=39 // pred_region
          %627 = vst [vmem:[#allocation8] sm:$0x3] 0.0
        $region48: #{tpu_custom_call.1} parent=39 // pred_fallthru
          _
        %v628 = vld [vmem:[#allocation8] sm:$0x3]
        %v629 = vadd.f32 %v628, %v622
        %630 = vst [vmem:[#allocation8] sm:$0x3] %v629
        %s631 = sand.u32 %s141, 1
        %s632 = scalar_lea.sflag [#allocation6], %s631
        %s633 = sand.u32 %s141, 1
        %s634 = smul.addr %s633, 8
        %s635 = scalar_lea.vmem [#allocation7], %s634
        // Predicated region
        $region49: #{tpu_custom_call.1} parent=39 // pred_check
          %p636 = pneg %p151
        $region50: #{tpu_custom_call.1} parent=39 // pred_check_branch
          %638 = sbr.rel (%p636) target = $region52
        $region51: #{tpu_custom_call.1} parent=39 // pred_region
          %s640 = ssub.s32 128, 128
          %641 = vsyncadd %s632, %s640
          %s642 = smul.addr %s23, 128
          %s643 = scalar_lea.hbm %s5, %s642
          %s645 = sshll.u32 %s635, 4
          %s646 = int_to_ptr.vmem [resolvable:$true] %s645
          %648 = dma.vmem_to_hbm [thread:$0]  %s646, 128, %s643, %s632
        $region52: #{tpu_custom_call.1} parent=39 // pred_fallthru
          _
        // Predicated region
        $region53: #{tpu_custom_call.1} parent=39 // pred_check
          %p649 = pneg %p172
        $region54: #{tpu_custom_call.1} parent=39 // pred_check_branch
          %651 = sbr.rel (%p649) target = $region56
        $region55: #{tpu_custom_call.1} parent=39 // pred_region
          %s653 = ssub.s32 32, 32
          %654 = vsyncadd [#allocation9], %s653
          %s656 = sshll.u32 [#allocation8], 4
          %s657 = int_to_ptr.vmem [resolvable:$true] %s656
          %659 = dma.vmem_to_hbm [thread:$0]  %s657, 32, %s6, [#allocation9]
        $region56: #{tpu_custom_call.1} parent=39 // pred_fallthru
          _
        // Predicated region
        $region57: #{tpu_custom_call.1} parent=39 // pred_check
          %p660 = pneg %p172
        $region58: #{tpu_custom_call.1} parent=39 // pred_check_branch
          %662 = sbr.rel (%p660) target = $region60
        $region59: #{tpu_custom_call.1} parent=39 // pred_region
          %663 = dma.done [#allocation9], 32
        $region60: #{tpu_custom_call.1} parent=39 // pred_fallthru
          _
      $region40: #{tpu_custom_call.1} parent=5 // pred_fallthru
        _
      %p664 = scmp.le.s32.totalorder 2, %s18
      // Predicated region
      $region61: #{tpu_custom_call.1} parent=5 // pred_check
        %p665 = pneg %p664
      $region62: #{tpu_custom_call.1} parent=5 // pred_check_branch
        %667 = sbr.rel (%p665) target = $region64
      $region63: #{tpu_custom_call.1} parent=5 // pred_region
        %s668 = ssub.s32 %s18, 2
        // Predicated region
        $region65: #{tpu_custom_call.1} parent=63 // pred_check
          %p669 = pneg %p157
        $region66: #{tpu_custom_call.1} parent=63 // pred_check_branch
          %671 = sbr.rel (%p669) target = $region68
        $region67: #{tpu_custom_call.1} parent=63 // pred_region
          %s672 = sand.u32 %s142, 1
          %s673 = scalar_lea.sflag [#allocation6], %s672
          %s674 = sand.u32 %s142, 1
          %s675 = smul.addr %s674, 8
          %s676 = scalar_lea.vmem [#allocation7], %s675
          %677 = dma.done %s673, 128
        $region68: #{tpu_custom_call.1} parent=63 // pred_fallthru
          _
      $region64: #{tpu_custom_call.1} parent=5 // pred_fallthru
        _
    $region6: #{tpu_custom_call.1} parent=1 // loop_footer
      %s22 = sadd.s32 1, %s18
    $region7: #{tpu_custom_call.1} parent=1 // loop_footer_branch
      %17 = sbr.rel target = $region3
    $region8: #{tpu_custom_call.1} parent=1 // loop_exit
      _
    %678 = vsyncpa [#allocation5], 1
    %s679 = scalar_lea.sflag [#allocation5], 1
    %680 = vsyncpa %s679, 1
    %681 = vsyncpa [#allocation6], 1
    %s682 = scalar_lea.sflag [#allocation6], 1
    %683 = vsyncpa %s682, 1
    %684 = vsyncpa [#allocation9], 1

</llo_original>
